<compile_context>
chip_gen: v7x
topology: tpu7x:2x2x1
jax: 0.10.0
libtpu: 0.0.40
codegen_flags: <defaults>
</compile_context>

<pallas_src>
import functools

import jax
import jax.numpy as jnp
from jax.experimental import pallas as pl
from jax.experimental.pallas import tpu as pltpu

# ---- hyper-parameters implied by MLPCritic defaults -------------------------
INPUT_DIM = 32
ACTION_DIM = 1
N_LAYERS = 3          # number of mid ("pyramid") blocks
NZ_MID = 64
OUTPUT_DIM = 1
LEAKY_SLOPE = 0.2     # spirl FCBlock default LeakyReLU slope


def _leaky_relu(z):
    return jnp.where(z >= 0, z, LEAKY_SLOPE * z)


def mlp_critic_kernel(obs_ref, act_ref,
                      w0_obs_ref, w0_act_ref, b0_ref,
                      w1_ref, b1_ref,
                      w2_ref, b2_ref,
                      w3_ref, b3_ref,
                      wh_ref, bh_ref,
                      out_ref):
    # Load weights / biases once per grid step (they are VMEM-resident; the
    # loads + broadcasts are hoisted to locals so each happens exactly once).
    w0_obs = w0_obs_ref[...]        # bf16 [32, 64]
    w0_act = w0_act_ref[...]        # f32  [1, 64]
    b0 = b0_ref[...]                # f32  [1, 64]
    w1 = w1_ref[...]                # bf16 [64, 64]
    b1 = b1_ref[...]
    w2 = w2_ref[...]                # bf16 [64, 64]
    b2 = b2_ref[...]
    w3 = w3_ref[...]                # bf16 [64, 64]
    b3 = b3_ref[...]
    wh = wh_ref[...]                # f32  [1, 64]   (head weight, pre-transposed)
    bh = bh_ref[...]                # f32  [1, 1]

    obs = obs_ref[...]              # bf16 [TB, 32]
    act1 = act_ref[...]             # f32  [TB, 1]   (actions[:, :action_dim])

    # input block: concat(obs, act1) @ W0 + b0, then LeakyReLU
    #   MXU:  obs @ W0[:32]  (bf16 in, f32 acc)
    #   VPU:  act1 * W0[32:] (K=1 outer product) + bias
    h = jnp.dot(obs, w0_obs, preferred_element_type=jnp.float32)
    h = _leaky_relu(h + act1 * w0_act + b0)

    # n_layers mid blocks: Linear(64,64) + LeakyReLU (bf16 operands, f32 acc)
    h = _leaky_relu(
        jnp.dot(h.astype(jnp.bfloat16), w1, preferred_element_type=jnp.float32) + b1)
    h = _leaky_relu(
        jnp.dot(h.astype(jnp.bfloat16), w2, preferred_element_type=jnp.float32) + b2)
    h = _leaky_relu(
        jnp.dot(h.astype(jnp.bfloat16), w3, preferred_element_type=jnp.float32) + b3)

    # head: Linear(64, 1) done as VPU multiply + lane reduction (no MXU pass).
    out_ref[...] = jnp.sum(h * wh, axis=-1, keepdims=True) + bh


def init_params(key):
    """Deterministic xavier-uniform-style init for all Linear layers."""
    def xavier(k, fan_in, fan_out):
        limit = jnp.sqrt(6.0 / (fan_in + fan_out))
        return jax.random.uniform(k, (fan_in, fan_out), jnp.float32, -limit, limit)

    in_size = INPUT_DIM + ACTION_DIM            # 33
    keys = jax.random.split(key, 5)
    params = {
        "w0": xavier(keys[0], in_size, NZ_MID),       # [33, 64]
        "b0": jnp.zeros((1, NZ_MID), jnp.float32),
        "w1": xavier(keys[1], NZ_MID, NZ_MID),
        "b1": jnp.zeros((1, NZ_MID), jnp.float32),
        "w2": xavier(keys[2], NZ_MID, NZ_MID),
        "b2": jnp.zeros((1, NZ_MID), jnp.float32),
        "w3": xavier(keys[3], NZ_MID, NZ_MID),
        "b3": jnp.zeros((1, NZ_MID), jnp.float32),
        "wh": xavier(keys[4], NZ_MID, OUTPUT_DIM),    # [64, 1]
        "bh": jnp.zeros((1, OUTPUT_DIM), jnp.float32),
    }
    return params


def _pick_batch_tile(batch):
    """Batch tile: a multiple of 8, capped at 512 (sweepable)."""
    if batch >= 512:
        return 512
    return max(8, ((batch + 7) // 8) * 8)


@functools.partial(jax.jit, static_argnames=())
def mlp_critic_forward(obs, actions, params):
    """Returns q = net(concat(obs, actions[:, :action_dim]))  with shape [B, 1]."""
    B = obs.shape[0]
    TB = _pick_batch_tile(B)
    n_tiles = pl.cdiv(B, TB)
    B_pad = n_tiles * TB

    # Wrapper-side prep:
    #   * slice actions to the dims actually used -> DMA only [B, 1]
    #   * cast MXU operands (obs + hidden weights) to bf16; biases / head stay f32
    #   * pad batch to a multiple of TB (zeros; extra rows sliced off below)
    obs_bf16 = obs.astype(jnp.bfloat16)
    act1 = actions[:, :ACTION_DIM].astype(jnp.float32)
    if B_pad != B:
        pad = B_pad - B
        obs_bf16 = jnp.pad(obs_bf16, ((0, pad), (0, 0)))
        act1 = jnp.pad(act1, ((0, pad), (0, 0)))

    # Split the first-layer weight so the concat becomes matmul + outer product.
    w0_obs = params["w0"][:INPUT_DIM, :].astype(jnp.bfloat16)   # [32, 64]
    w0_act = params["w0"][INPUT_DIM:, :]                        # [1, 64] (f32, VPU)
    w1 = params["w1"].astype(jnp.bfloat16)
    w2 = params["w2"].astype(jnp.bfloat16)
    w3 = params["w3"].astype(jnp.bfloat16)
    wh_row = params["wh"].T                                     # [1, 64] (f32, VPU)

    # Batch-blocked specs for data; constant index_map keeps weights resident.
    def batch_spec(feat):
        return pl.BlockSpec((TB, feat), lambda i: (i, 0))

    def resident_spec(shape):
        return pl.BlockSpec(shape, lambda i: (0, 0))

    operands = (obs_bf16, act1,
                w0_obs, w0_act, params["b0"],
                w1, params["b1"],
                w2, params["b2"],
                w3, params["b3"],
                wh_row, params["bh"])

    in_specs = [
        batch_spec(INPUT_DIM),                      # obs
        batch_spec(ACTION_DIM),                     # actions[:, :1]
        resident_spec((INPUT_DIM, NZ_MID)),         # w0_obs
        resident_spec((ACTION_DIM, NZ_MID)),        # w0_act
        resident_spec((1, NZ_MID)),                 # b0
        resident_spec((NZ_MID, NZ_MID)),            # w1
        resident_spec((1, NZ_MID)),                 # b1
        resident_spec((NZ_MID, NZ_MID)),            # w2
        resident_spec((1, NZ_MID)),                 # b2
        resident_spec((NZ_MID, NZ_MID)),            # w3
        resident_spec((1, NZ_MID)),                 # b3
        resident_spec((1, NZ_MID)),                 # wh_row
        resident_spec((1, OUTPUT_DIM)),             # bh
    ]

    flops = 2 * B_pad * (INPUT_DIM * NZ_MID + N_LAYERS * NZ_MID * NZ_MID + NZ_MID)
    bytes_accessed = (B_pad * (INPUT_DIM * 2 + ACTION_DIM * 4 + OUTPUT_DIM * 4)
                      + (INPUT_DIM * NZ_MID + N_LAYERS * NZ_MID * NZ_MID) * 2
                      + (5 * NZ_MID + 2 * NZ_MID + OUTPUT_DIM) * 4)

    q_pad = pl.pallas_call(
        mlp_critic_kernel,
        out_shape=jax.ShapeDtypeStruct((B_pad, OUTPUT_DIM), jnp.float32),
        grid=(n_tiles,),
        in_specs=in_specs,
        out_specs=batch_spec(OUTPUT_DIM),
        compiler_params=pltpu.CompilerParams(
            dimension_semantics=("parallel",),
            vmem_limit_bytes=16 * 1024 * 1024,
        ),
        cost_estimate=pl.CostEstimate(
            flops=flops, transcendentals=0, bytes_accessed=bytes_accessed),
    )(*operands)

    return q_pad[:B]


def mlp_critic_reference(obs, actions, params):
    """Plain-JAX reference mirroring the kernel math (bf16 dot operands, f32 acc)."""
    obs_bf16 = obs.astype(jnp.bfloat16)
    act1 = actions[:, :ACTION_DIM].astype(jnp.float32)

    w0_obs = params["w0"][:INPUT_DIM, :].astype(jnp.bfloat16)
    w0_act = params["w0"][INPUT_DIM:, :]

    h = jnp.dot(obs_bf16, w0_obs, preferred_element_type=jnp.float32)
    h = _leaky_relu(h + act1 * w0_act + params["b0"])
    for name_w, name_b in (("w1", "b1"), ("w2", "b2"), ("w3", "b3")):
        h = _leaky_relu(
            jnp.dot(h.astype(jnp.bfloat16), params[name_w].astype(jnp.bfloat16),
                    preferred_element_type=jnp.float32) + params[name_b])
    return jnp.sum(h * params["wh"].T, axis=-1, keepdims=True) + params["bh"]


def mlp_critic_reference_f32(obs, actions, params):
    """Full-precision reference of the original module (sanity check only)."""
    x = jnp.concatenate([obs, actions[:, :ACTION_DIM]], axis=-1)
    h = _leaky_relu(x @ params["w0"] + params["b0"])
    h = _leaky_relu(h @ params["w1"] + params["b1"])
    h = _leaky_relu(h @ params["w2"] + params["b2"])
    h = _leaky_relu(h @ params["w3"] + params["b3"])
    return h @ params["wh"] + params["bh"]


if __name__ == "__main__":
    key = jax.random.PRNGKey(0)
    k_obs, k_act, k_par = jax.random.split(key, 3)

    B = 2
    FULL_ACTION_DIM = 4   # actions carry more dims; forward only uses the first one
    obs = jax.random.normal(k_obs, (B, INPUT_DIM), jnp.float32)
    actions = jax.random.normal(k_act, (B, FULL_ACTION_DIM), jnp.float32)
    params = init_params(k_par)

    q = mlp_critic_forward(obs, actions, params)
    q = jax.block_until_ready(q)
    assert q.shape == (B, OUTPUT_DIM)

    # Tight check against a reference that uses the same bf16-operand / f32-acc math.
    q_ref = mlp_critic_reference(obs, actions, params)
    assert jnp.allclose(q, q_ref, atol=1e-3, rtol=1e-3), (q, q_ref)

    # Loose check against the exact f32 module semantics (bf16 matmul tolerance).
    q_f32 = mlp_critic_reference_f32(obs, actions, params)
    assert jnp.allclose(q, q_f32, atol=5e-2, rtol=5e-2), (q, q_f32)

    print("KERNEL_OK")
</pallas_src>

<mosaic_0001>
module attributes {stable_mosaic.version = 11 : i64} {
  func.func @mlp_critic_kernel(%arg0: i32, %arg1: memref<8x32xbf16, #tpu.memory_space<vmem>>, %arg2: memref<8x1xf32, #tpu.memory_space<vmem>>, %arg3: memref<32x64xbf16, #tpu.memory_space<vmem>>, %arg4: memref<1x64xf32, #tpu.memory_space<vmem>>, %arg5: memref<1x64xf32, #tpu.memory_space<vmem>>, %arg6: memref<64x64xbf16, #tpu.memory_space<vmem>>, %arg7: memref<1x64xf32, #tpu.memory_space<vmem>>, %arg8: memref<64x64xbf16, #tpu.memory_space<vmem>>, %arg9: memref<1x64xf32, #tpu.memory_space<vmem>>, %arg10: memref<64x64xbf16, #tpu.memory_space<vmem>>, %arg11: memref<1x64xf32, #tpu.memory_space<vmem>>, %arg12: memref<1x64xf32, #tpu.memory_space<vmem>>, %arg13: memref<1x1xf32, #tpu.memory_space<vmem>>, %arg14: memref<8x1xf32, #tpu.memory_space<vmem>>) attributes {dimension_semantics = [#tpu.dimension_semantics<parallel>], iteration_bounds = array<i64: 1>, scalar_prefetch = 0 : i64, scratch_operands = 0 : i64, tpu.core_type = #tpu.core_type<tc>, window_params = [{transform_indices = @transform_0, window_bounds = array<i64: 8, 32>}, {transform_indices = @transform_1, window_bounds = array<i64: 8, 1>}, {pipeline_mode = #tpu.pipeline_mode<synchronous>, transform_indices = @transform_2, window_bounds = array<i64: 32, 64>}, {pipeline_mode = #tpu.pipeline_mode<synchronous>, transform_indices = @transform_3, window_bounds = array<i64: 1, 64>}, {pipeline_mode = #tpu.pipeline_mode<synchronous>, transform_indices = @transform_4, window_bounds = array<i64: 1, 64>}, {pipeline_mode = #tpu.pipeline_mode<synchronous>, transform_indices = @transform_5, window_bounds = array<i64: 64, 64>}, {pipeline_mode = #tpu.pipeline_mode<synchronous>, transform_indices = @transform_6, window_bounds = array<i64: 1, 64>}, {pipeline_mode = #tpu.pipeline_mode<synchronous>, transform_indices = @transform_7, window_bounds = array<i64: 64, 64>}, {pipeline_mode = #tpu.pipeline_mode<synchronous>, transform_indices = @transform_8, window_bounds = array<i64: 1, 64>}, {pipeline_mode = #tpu.pipeline_mode<synchronous>, transform_indices = @transform_9, window_bounds = array<i64: 64, 64>}, {pipeline_mode = #tpu.pipeline_mode<synchronous>, transform_indices = @transform_10, window_bounds = array<i64: 1, 64>}, {pipeline_mode = #tpu.pipeline_mode<synchronous>, transform_indices = @transform_11, window_bounds = array<i64: 1, 64>}, {pipeline_mode = #tpu.pipeline_mode<synchronous>, transform_indices = @transform_12, window_bounds = array<i64: 1, 1>}, {transform_indices = @transform_13, window_bounds = array<i64: 8, 1>}]} {
    %c0 = arith.constant 0 : index
    %c0_0 = arith.constant 0 : index
    %0 = vector.load %arg3[%c0, %c0_0] : memref<32x64xbf16, #tpu.memory_space<vmem>>, vector<32x64xbf16>
    %c0_1 = arith.constant 0 : index
    %c0_2 = arith.constant 0 : index
    %1 = vector.load %arg4[%c0_1, %c0_2] : memref<1x64xf32, #tpu.memory_space<vmem>>, vector<1x64xf32>
    %c0_3 = arith.constant 0 : index
    %c0_4 = arith.constant 0 : index
    %2 = vector.load %arg5[%c0_3, %c0_4] : memref<1x64xf32, #tpu.memory_space<vmem>>, vector<1x64xf32>
    %c0_5 = arith.constant 0 : index
    %c0_6 = arith.constant 0 : index
    %3 = vector.load %arg6[%c0_5, %c0_6] : memref<64x64xbf16, #tpu.memory_space<vmem>>, vector<64x64xbf16>
    %c0_7 = arith.constant 0 : index
    %c0_8 = arith.constant 0 : index
    %4 = vector.load %arg7[%c0_7, %c0_8] : memref<1x64xf32, #tpu.memory_space<vmem>>, vector<1x64xf32>
    %c0_9 = arith.constant 0 : index
    %c0_10 = arith.constant 0 : index
    %5 = vector.load %arg8[%c0_9, %c0_10] : memref<64x64xbf16, #tpu.memory_space<vmem>>, vector<64x64xbf16>
    %c0_11 = arith.constant 0 : index
    %c0_12 = arith.constant 0 : index
    %6 = vector.load %arg9[%c0_11, %c0_12] : memref<1x64xf32, #tpu.memory_space<vmem>>, vector<1x64xf32>
    %c0_13 = arith.constant 0 : index
    %c0_14 = arith.constant 0 : index
    %7 = vector.load %arg10[%c0_13, %c0_14] : memref<64x64xbf16, #tpu.memory_space<vmem>>, vector<64x64xbf16>
    %c0_15 = arith.constant 0 : index
    %c0_16 = arith.constant 0 : index
    %8 = vector.load %arg11[%c0_15, %c0_16] : memref<1x64xf32, #tpu.memory_space<vmem>>, vector<1x64xf32>
    %c0_17 = arith.constant 0 : index
    %c0_18 = arith.constant 0 : index
    %9 = vector.load %arg12[%c0_17, %c0_18] : memref<1x64xf32, #tpu.memory_space<vmem>>, vector<1x64xf32>
    %c0_19 = arith.constant 0 : index
    %c0_20 = arith.constant 0 : index
    %10 = vector.load %arg13[%c0_19, %c0_20] : memref<1x1xf32, #tpu.memory_space<vmem>>, vector<1x1xf32>
    %c0_21 = arith.constant 0 : index
    %c0_22 = arith.constant 0 : index
    %11 = vector.load %arg1[%c0_21, %c0_22] : memref<8x32xbf16, #tpu.memory_space<vmem>>, vector<8x32xbf16>
    %c0_23 = arith.constant 0 : index
    %c0_24 = arith.constant 0 : index
    %12 = vector.load %arg2[%c0_23, %c0_24] : memref<8x1xf32, #tpu.memory_space<vmem>>, vector<8x1xf32>
    %cst = arith.constant dense<0.000000e+00> : vector<8x64xf32>
    %13 = tpu.matmul %11, %0, %cst {dimension_numbers = #tpu.dot_dimension_numbers<[1], [0], [0], [1], [0, 0, 1, 1], [], []>} : vector<8x32xbf16>, vector<32x64xbf16>, vector<8x64xf32> -> vector<8x64xf32>
    %14 = vector.broadcast %12 : vector<8x1xf32> to vector<8x64xf32>
    %15 = vector.broadcast %1 : vector<1x64xf32> to vector<8x64xf32>
    %16 = arith.mulf %14, %15 : vector<8x64xf32>
    %17 = arith.addf %13, %16 : vector<8x64xf32>
    %18 = vector.broadcast %2 : vector<1x64xf32> to vector<8x64xf32>
    %19 = arith.addf %17, %18 : vector<8x64xf32>
    %cst_25 = arith.constant 0.000000e+00 : f32
    %20 = vector.broadcast %cst_25 : f32 to vector<8x64xf32>
    %21 = arith.cmpf oge, %19, %20 : vector<8x64xf32>
    %cst_26 = arith.constant 2.000000e-01 : f32
    %22 = vector.broadcast %cst_26 : f32 to vector<8x64xf32>
    %23 = arith.mulf %22, %19 : vector<8x64xf32>
    %24 = arith.select %21, %19, %23 : vector<8x64xi1>, vector<8x64xf32>
    %25 = arith.truncf %24 : vector<8x64xf32> to vector<8x64xbf16>
    %cst_27 = arith.constant dense<0.000000e+00> : vector<8x64xf32>
    %26 = tpu.matmul %25, %3, %cst_27 {dimension_numbers = #tpu.dot_dimension_numbers<[1], [0], [0], [1], [0, 0, 1, 1], [], []>} : vector<8x64xbf16>, vector<64x64xbf16>, vector<8x64xf32> -> vector<8x64xf32>
    %27 = vector.broadcast %4 : vector<1x64xf32> to vector<8x64xf32>
    %28 = arith.addf %26, %27 : vector<8x64xf32>
    %cst_28 = arith.constant 0.000000e+00 : f32
    %29 = vector.broadcast %cst_28 : f32 to vector<8x64xf32>
    %30 = arith.cmpf oge, %28, %29 : vector<8x64xf32>
    %cst_29 = arith.constant 2.000000e-01 : f32
    %31 = vector.broadcast %cst_29 : f32 to vector<8x64xf32>
    %32 = arith.mulf %31, %28 : vector<8x64xf32>
    %33 = arith.select %30, %28, %32 : vector<8x64xi1>, vector<8x64xf32>
    %34 = arith.truncf %33 : vector<8x64xf32> to vector<8x64xbf16>
    %cst_30 = arith.constant dense<0.000000e+00> : vector<8x64xf32>
    %35 = tpu.matmul %34, %5, %cst_30 {dimension_numbers = #tpu.dot_dimension_numbers<[1], [0], [0], [1], [0, 0, 1, 1], [], []>} : vector<8x64xbf16>, vector<64x64xbf16>, vector<8x64xf32> -> vector<8x64xf32>
    %36 = vector.broadcast %6 : vector<1x64xf32> to vector<8x64xf32>
    %37 = arith.addf %35, %36 : vector<8x64xf32>
    %cst_31 = arith.constant 0.000000e+00 : f32
    %38 = vector.broadcast %cst_31 : f32 to vector<8x64xf32>
    %39 = arith.cmpf oge, %37, %38 : vector<8x64xf32>
    %cst_32 = arith.constant 2.000000e-01 : f32
    %40 = vector.broadcast %cst_32 : f32 to vector<8x64xf32>
    %41 = arith.mulf %40, %37 : vector<8x64xf32>
    %42 = arith.select %39, %37, %41 : vector<8x64xi1>, vector<8x64xf32>
    %43 = arith.truncf %42 : vector<8x64xf32> to vector<8x64xbf16>
    %cst_33 = arith.constant dense<0.000000e+00> : vector<8x64xf32>
    %44 = tpu.matmul %43, %7, %cst_33 {dimension_numbers = #tpu.dot_dimension_numbers<[1], [0], [0], [1], [0, 0, 1, 1], [], []>} : vector<8x64xbf16>, vector<64x64xbf16>, vector<8x64xf32> -> vector<8x64xf32>
    %45 = vector.broadcast %8 : vector<1x64xf32> to vector<8x64xf32>
    %46 = arith.addf %44, %45 : vector<8x64xf32>
    %cst_34 = arith.constant 0.000000e+00 : f32
    %47 = vector.broadcast %cst_34 : f32 to vector<8x64xf32>
    %48 = arith.cmpf oge, %46, %47 : vector<8x64xf32>
    %cst_35 = arith.constant 2.000000e-01 : f32
    %49 = vector.broadcast %cst_35 : f32 to vector<8x64xf32>
    %50 = arith.mulf %49, %46 : vector<8x64xf32>
    %51 = arith.select %48, %46, %50 : vector<8x64xi1>, vector<8x64xf32>
    %52 = vector.broadcast %9 : vector<1x64xf32> to vector<8x64xf32>
    %53 = arith.mulf %51, %52 : vector<8x64xf32>
    %cst_36 = arith.constant dense<0.000000e+00> : vector<8xf32>
    %54 = vector.multi_reduction <add>, %53, %cst_36 [1] : vector<8x64xf32> to vector<8xf32>
    %55 = vector.shape_cast %54 : vector<8xf32> to vector<8x1xf32>
    %56 = vector.broadcast %10 : vector<1x1xf32> to vector<8x1xf32>
    %57 = arith.addf %55, %56 : vector<8x1xf32>
    %c0_37 = arith.constant 0 : index
    %c0_38 = arith.constant 0 : index
    %58 = vector.load %arg14[%c0_37, %c0_38] : memref<8x1xf32, #tpu.memory_space<vmem>>, vector<8x1xf32>
    tpu.vector_store %arg14[%c0_37, %c0_38], %57 {strides = array<i32>} : memref<8x1xf32, #tpu.memory_space<vmem>>, vector<8x1xf32>,
    return
  }
  func.func @transform_0(%arg0: i32) -> (i32, i32) {
    %c0_i32 = arith.constant 0 : i32
    %c0_i32_0 = arith.constant 0 : i32
    return %arg0, %c0_i32 : i32, i32
  }
  func.func @transform_1(%arg0: i32) -> (i32, i32) {
    %c0_i32 = arith.constant 0 : i32
    %c0_i32_0 = arith.constant 0 : i32
    return %arg0, %c0_i32 : i32, i32
  }
  func.func @transform_2(%arg0: i32) -> (i32, i32) {
    %c0_i32 = arith.constant 0 : i32
    %c0_i32_0 = arith.constant 0 : i32
    %c0_i32_1 = arith.constant 0 : i32
    return %c0_i32, %c0_i32_0 : i32, i32
  }
  func.func @transform_3(%arg0: i32) -> (i32, i32) {
    %c0_i32 = arith.constant 0 : i32
    %c0_i32_0 = arith.constant 0 : i32
    %c0_i32_1 = arith.constant 0 : i32
    return %c0_i32, %c0_i32_0 : i32, i32
  }
  func.func @transform_4(%arg0: i32) -> (i32, i32) {
    %c0_i32 = arith.constant 0 : i32
    %c0_i32_0 = arith.constant 0 : i32
    %c0_i32_1 = arith.constant 0 : i32
    return %c0_i32, %c0_i32_0 : i32, i32
  }
  func.func @transform_5(%arg0: i32) -> (i32, i32) {
    %c0_i32 = arith.constant 0 : i32
    %c0_i32_0 = arith.constant 0 : i32
    %c0_i32_1 = arith.constant 0 : i32
    return %c0_i32, %c0_i32_0 : i32, i32
  }
  func.func @transform_6(%arg0: i32) -> (i32, i32) {
    %c0_i32 = arith.constant 0 : i32
    %c0_i32_0 = arith.constant 0 : i32
    %c0_i32_1 = arith.constant 0 : i32
    return %c0_i32, %c0_i32_0 : i32, i32
  }
  func.func @transform_7(%arg0: i32) -> (i32, i32) {
    %c0_i32 = arith.constant 0 : i32
    %c0_i32_0 = arith.constant 0 : i32
    %c0_i32_1 = arith.constant 0 : i32
    return %c0_i32, %c0_i32_0 : i32, i32
  }
  func.func @transform_8(%arg0: i32) -> (i32, i32) {
    %c0_i32 = arith.constant 0 : i32
    %c0_i32_0 = arith.constant 0 : i32
    %c0_i32_1 = arith.constant 0 : i32
    return %c0_i32, %c0_i32_0 : i32, i32
  }
  func.func @transform_9(%arg0: i32) -> (i32, i32) {
    %c0_i32 = arith.constant 0 : i32
    %c0_i32_0 = arith.constant 0 : i32
    %c0_i32_1 = arith.constant 0 : i32
    return %c0_i32, %c0_i32_0 : i32, i32
  }
  func.func @transform_10(%arg0: i32) -> (i32, i32) {
    %c0_i32 = arith.constant 0 : i32
    %c0_i32_0 = arith.constant 0 : i32
    %c0_i32_1 = arith.constant 0 : i32
    return %c0_i32, %c0_i32_0 : i32, i32
  }
  func.func @transform_11(%arg0: i32) -> (i32, i32) {
    %c0_i32 = arith.constant 0 : i32
    %c0_i32_0 = arith.constant 0 : i32
    %c0_i32_1 = arith.constant 0 : i32
    return %c0_i32, %c0_i32_0 : i32, i32
  }
  func.func @transform_12(%arg0: i32) -> (i32, i32) {
    %c0_i32 = arith.constant 0 : i32
    %c0_i32_0 = arith.constant 0 : i32
    %c0_i32_1 = arith.constant 0 : i32
    return %c0_i32, %c0_i32_0 : i32, i32
  }
  func.func @transform_13(%arg0: i32) -> (i32, i32) {
    %c0_i32 = arith.constant 0 : i32
    %c0_i32_0 = arith.constant 0 : i32
    return %arg0, %c0_i32 : i32, i32
  }
}

</mosaic_0001>

<llo_original>
// kernel: mlp_critic_forward.1
$region0: #{mlp_critic_forward.1}
  #allocation0 [shape = 'u32[]', space=smem, size = 0x4, offset = 0x4, fixed_abs, tag = 'smem constant byte address 0x4 - core index']
  #allocation1 [shape = 'u32[144,128]{1,0:T(1,128)}', space=vmem, size = 0x12000, scoped, tag = 'internal scratch']
  #allocation2 [shape = 'f32[1,1]{1,0:T(1,128)S(1)}', space=vmem, size = 0x200, scoped, tag = 'scoped memory for mlp_critic_forward.1']
  %s0 = inlined_call_operand.vmem [shape: bf16[8,32], index: 0, kind: input, shape index: {}]
  %s1 = inlined_call_operand.vmem [shape: f32[8,1], index: 1, kind: input, shape index: {}]
  %s2 = inlined_call_operand.vmem [shape: bf16[32,64], index: 2, kind: input, shape index: {}]
  %s3 = inlined_call_operand.vmem [shape: f32[1,64], index: 3, kind: input, shape index: {}]
  %s4 = inlined_call_operand.vmem [shape: f32[1,64], index: 4, kind: input, shape index: {}]
  %s5 = inlined_call_operand.vmem [shape: bf16[64,64], index: 5, kind: input, shape index: {}]
  %s6 = inlined_call_operand.vmem [shape: f32[1,64], index: 6, kind: input, shape index: {}]
  %s7 = inlined_call_operand.vmem [shape: bf16[64,64], index: 7, kind: input, shape index: {}]
  %s8 = inlined_call_operand.vmem [shape: f32[1,64], index: 8, kind: input, shape index: {}]
  %s9 = inlined_call_operand.vmem [shape: bf16[64,64], index: 9, kind: input, shape index: {}]
  %s10 = inlined_call_operand.vmem [shape: f32[1,64], index: 10, kind: input, shape index: {}]
  %s11 = inlined_call_operand.vmem [shape: f32[1,64], index: 11, kind: input, shape index: {}]
  %s12 = inlined_call_operand.<no memory space> [shape: f32[1,1], index: 12, kind: input, shape index: {}]
  %s13 = inlined_call_operand.vmem [shape: f32[8,1], index: 13, kind: output, shape index: {}]
  %s14 = sld [smem:[#allocation0]]
  $region62: #{mlp_critic_forward.1} parent=0
    _
  %s16 = ssub.s32 1, %s14
  %s17 = scalar_select 0, %s16, %s14
  %v18 = vstv %s12
  %19 = vst [vmem:[#allocation2] sm:$0x1] %v18
  // Predicated region
  $region2: #{mlp_critic_forward.1} parent=0 // pred_check
    _
  $region3: #{mlp_critic_forward.1} parent=0 // pred_check_branch
    %21 = sbr.rel (0) target = $region5
  $region4: #{mlp_critic_forward.1} parent=0 // pred_region
    _
  $region5: #{mlp_critic_forward.1} parent=0 // pred_fallthru
    _
  // Predicated region
  $region6: #{mlp_critic_forward.1} parent=0 // pred_check
    _
  $region7: #{mlp_critic_forward.1} parent=0 // pred_check_branch
    %23 = sbr.rel (0) target = $region9
  $region8: #{mlp_critic_forward.1} parent=0 // pred_region
    _
  $region9: #{mlp_critic_forward.1} parent=0 // pred_fallthru
    _
  // Predicated region
  $region10: #{mlp_critic_forward.1} parent=0 // pred_check
    _
  $region11: #{mlp_critic_forward.1} parent=0 // pred_check_branch
    %25 = sbr.rel (0) target = $region13
  $region12: #{mlp_critic_forward.1} parent=0 // pred_region
    _
  $region13: #{mlp_critic_forward.1} parent=0 // pred_fallthru
    _
  // Predicated region
  $region14: #{mlp_critic_forward.1} parent=0 // pred_check
    _
  $region15: #{mlp_critic_forward.1} parent=0 // pred_check_branch
    %27 = sbr.rel (0) target = $region17
  $region16: #{mlp_critic_forward.1} parent=0 // pred_region
    _
  $region17: #{mlp_critic_forward.1} parent=0 // pred_fallthru
    _
  // Predicated region
  $region18: #{mlp_critic_forward.1} parent=0 // pred_check
    _
  $region19: #{mlp_critic_forward.1} parent=0 // pred_check_branch
    %29 = sbr.rel (0) target = $region21
  $region20: #{mlp_critic_forward.1} parent=0 // pred_region
    _
  $region21: #{mlp_critic_forward.1} parent=0 // pred_fallthru
    _
  // Predicated region
  $region22: #{mlp_critic_forward.1} parent=0 // pred_check
    _
  $region23: #{mlp_critic_forward.1} parent=0 // pred_check_branch
    %31 = sbr.rel (0) target = $region25
  $region24: #{mlp_critic_forward.1} parent=0 // pred_region
    _
  $region25: #{mlp_critic_forward.1} parent=0 // pred_fallthru
    _
  // Predicated region
  $region26: #{mlp_critic_forward.1} parent=0 // pred_check
    _
  $region27: #{mlp_critic_forward.1} parent=0 // pred_check_branch
    %33 = sbr.rel (0) target = $region29
  $region28: #{mlp_critic_forward.1} parent=0 // pred_region
    _
  $region29: #{mlp_critic_forward.1} parent=0 // pred_fallthru
    _
  // Predicated region
  $region30: #{mlp_critic_forward.1} parent=0 // pred_check
    _
  $region31: #{mlp_critic_forward.1} parent=0 // pred_check_branch
    %35 = sbr.rel (0) target = $region33
  $region32: #{mlp_critic_forward.1} parent=0 // pred_region
    _
  $region33: #{mlp_critic_forward.1} parent=0 // pred_fallthru
    _
  // Predicated region
  $region34: #{mlp_critic_forward.1} parent=0 // pred_check
    _
  $region35: #{mlp_critic_forward.1} parent=0 // pred_check_branch
    %37 = sbr.rel (0) target = $region37
  $region36: #{mlp_critic_forward.1} parent=0 // pred_region
    _
  $region37: #{mlp_critic_forward.1} parent=0 // pred_fallthru
    _
  // Predicated region
  $region38: #{mlp_critic_forward.1} parent=0 // pred_check
    _
  $region39: #{mlp_critic_forward.1} parent=0 // pred_check_branch
    %39 = sbr.rel (0) target = $region41
  $region40: #{mlp_critic_forward.1} parent=0 // pred_region
    _
  $region41: #{mlp_critic_forward.1} parent=0 // pred_fallthru
    _
  // Predicated region
  $region42: #{mlp_critic_forward.1} parent=0 // pred_check
    _
  $region43: #{mlp_critic_forward.1} parent=0 // pred_check_branch
    %41 = sbr.rel (0) target = $region45
  $region44: #{mlp_critic_forward.1} parent=0 // pred_region
    _
  $region45: #{mlp_critic_forward.1} parent=0 // pred_fallthru
    _
  // Predicated region
  $region46: #{mlp_critic_forward.1} parent=0 // pred_check
    _
  $region47: #{mlp_critic_forward.1} parent=0 // pred_check_branch
    %43 = sbr.rel (0) target = $region49
  $region48: #{mlp_critic_forward.1} parent=0 // pred_region
    _
  $region49: #{mlp_critic_forward.1} parent=0 // pred_fallthru
    _
  // Predicated region
  $region50: #{mlp_critic_forward.1} parent=0 // pred_check
    _
  $region51: #{mlp_critic_forward.1} parent=0 // pred_check_branch
    %45 = sbr.rel (0) target = $region53
  $region52: #{mlp_critic_forward.1} parent=0 // pred_region
    _
  $region53: #{mlp_critic_forward.1} parent=0 // pred_fallthru
    _
  %v47 = vld [vmem:[%s2] sm:$0xf]
  %v48 = vld [vmem:[%s2 + $0x4] sm:$0xf]
  %v49 = vld [vmem:[%s2 + $0x8] sm:$0xf]
  %v50 = vld [vmem:[%s2 + $0xc] sm:$0xf]
  %v51 = vld [vmem:[%s3] sm:$0x1]
  %v52 = vld [vmem:[%s4] sm:$0x1]
  %v53 = vld [vmem:[%s5] sm:$0xf]
  %v54 = vld [vmem:[%s5 + $0x4] sm:$0xf]
  %v55 = vld [vmem:[%s5 + $0x8] sm:$0xf]
  %v56 = vld [vmem:[%s5 + $0xc] sm:$0xf]
  %v57 = vld [vmem:[%s5 + $0x10] sm:$0xf]
  %v58 = vld [vmem:[%s5 + $0x14] sm:$0xf]
  %v59 = vld [vmem:[%s5 + $0x18] sm:$0xf]
  %v60 = vld [vmem:[%s5 + $0x1c] sm:$0xf]
  %v61 = vld [vmem:[%s6] sm:$0x1]
  %v62 = vld [vmem:[%s7] sm:$0xf]
  %v63 = vld [vmem:[%s7 + $0x4] sm:$0xf]
  %v64 = vld [vmem:[%s7 + $0x8] sm:$0xf]
  %v65 = vld [vmem:[%s7 + $0xc] sm:$0xf]
  %v66 = vld [vmem:[%s7 + $0x10] sm:$0xf]
  %v67 = vld [vmem:[%s7 + $0x14] sm:$0xf]
  %v68 = vld [vmem:[%s7 + $0x18] sm:$0xf]
  %v69 = vld [vmem:[%s7 + $0x1c] sm:$0xf]
  %v70 = vld [vmem:[%s8] sm:$0x1]
  %v71 = vld [vmem:[%s9] sm:$0xf]
  %v72 = vld [vmem:[%s9 + $0x4] sm:$0xf]
  %v73 = vld [vmem:[%s9 + $0x8] sm:$0xf]
  %v74 = vld [vmem:[%s9 + $0xc] sm:$0xf]
  %v75 = vld [vmem:[%s9 + $0x10] sm:$0xf]
  %v76 = vld [vmem:[%s9 + $0x14] sm:$0xf]
  %v77 = vld [vmem:[%s9 + $0x18] sm:$0xf]
  %v78 = vld [vmem:[%s9 + $0x1c] sm:$0xf]
  %v79 = vld [vmem:[%s10] sm:$0x1]
  %v80 = vld [vmem:[%s11] sm:$0x1]
  %v81 = vld [vmem:[#allocation2] sm:$0x1]
  %v82 = vld [vmem:[%s0] sm:$0xf]
  %v83 = vld [vmem:[%s1] sm:$0xff]
  %85 = vset.pattern.permute.xlu0 0
  %86 = vperm.xlu0 %85, %v83
  %v87 = vpop.permute.xlu0 %86
  %v90 = vlaneseq
  %v91 = vshrl.u32 %v90, 7
  %v92 = vsub.s32 0, %v91
  %v93 = vrot.slane %v51, %v92
  %v95 = vmul.f32 %v87, %v93
  %v100 = vunpack.c.l.b16 %v47
  %v101 = vunpack.c.l.b16 %v48
  %v102 = vunpack.c.l.b16 %v49
  %v103 = vunpack.c.l.b16 %v50
  %v104 = vpack.c.b16 %v101, %v100
  %v105 = vpack.c.b16 %v103, %v102
  %vm108 = vcmask 261120
  %v110 = vsel %vm108, %v82, 0
  %112 = vmatprep.subr.bf16.mxu0 0
  %113 = vmatpush1.bf16.msra.mxu0 %v104
  %114 = vmatprep.subr.bf16.mxu0 0
  %115 = vmatpush1.bf16.msra.mxu0 %v105
  %116 = vmatprep.subr.bf16.mxu0 0
  %117 = vmatpush1.bf16.msra.mxu0 0
  %118 = vmatprep.subr.bf16.mxu0 0
  %119 = vmatpush1.bf16.msra.mxu0 0
  %120 = vmatprep.subr.bf16.mxu0 0
  %121 = vmatpush1.bf16.msra.mxu0 0
  %122 = vmatprep.subr.bf16.mxu0 0
  %123 = vmatpush1.bf16.msra.mxu0 0
  %124 = vmatprep.subr.bf16.mxu0 0
  %125 = vmatpush1.bf16.msra.mxu0 0
  %126 = vmatprep.subr.bf16.mxu0 0
  %127 = vmatpush1.bf16.msra.mxu0 0
  %128 = vmatprep.subr.bf16.mxu0 0
  %129 = vmatpush1.bf16.msra.mxu0 0
  %130 = vmatprep.subr.bf16.mxu0 0
  %131 = vmatpush1.bf16.msra.mxu0 0
  %132 = vmatprep.subr.bf16.mxu0 0
  %133 = vmatpush1.bf16.msra.mxu0 0
  %134 = vmatprep.subr.bf16.mxu0 0
  %135 = vmatpush1.bf16.msra.mxu0 0
  %136 = vmatprep.subr.bf16.mxu0 0
  %137 = vmatpush1.bf16.msra.mxu0 0
  %138 = vmatprep.subr.bf16.mxu0 0
  %139 = vmatpush1.bf16.msra.mxu0 0
  %140 = vmatprep.subr.bf16.mxu0 0
  %141 = vmatpush1.bf16.msra.mxu0 0
  %142 = vmatprep.subr.bf16.mxu0 0
  %143 = vmatpush1.bf16.msra.mxu0 0
  %144 = vmatprep.mubr.bf16.mxu0 0
  %145 = vmatmul.mubr.bf16.gmra.mrb[0].mxu0 %v110
  %v146 = vpop.f32.mrb[0].mxu0
  %v147 = vadd.f32 %v95, %v146
  %v148 = vpop.f32.mrb[0].mxu0
  %v149 = vpop.f32.mrb[0].mxu0
  %v150 = vpop.f32.mrb[0].mxu0
  %151 = vdwg.mxu0
  %v153 = vlaneseq
  %v154 = vshrl.u32 %v153, 7
  %v155 = vsub.s32 0, %v154
  %v156 = vrot.slane %v52, %v155
  %v158 = vadd.f32 %v147, %v156
  %vm159 = vcmp.ge.f32.partialorder %v158, 0.0
  %v160 = vmul.f32 %v158, 0.2
  %v161 = vsel %vm159, %v158, %v160
  %v162 = vpack.c.bf16 %v161, %v161
  %v164 = vlaneseq
  %v165 = vshrl.u32 %v164, 7
  %v166 = vsub.s32 0, %v165
  %v167 = vrot.slane %v61, %v166
  %v177 = vunpack.c.l.b16 %v53
  %v178 = vunpack.c.l.b16 %v54
  %v179 = vunpack.c.l.b16 %v55
  %v180 = vunpack.c.l.b16 %v56
  %v181 = vunpack.c.l.b16 %v57
  %v182 = vunpack.c.l.b16 %v58
  %v183 = vunpack.c.l.b16 %v59
  %v184 = vunpack.c.l.b16 %v60
  %v185 = vpack.c.b16 %v178, %v177
  %v186 = vpack.c.b16 %v180, %v179
  %v187 = vpack.c.b16 %v182, %v181
  %v188 = vpack.c.b16 %v184, %v183
  %vm193 = vcmask 523264
  %v195 = vsel %vm193, %v162, 0
  %197 = vmatprep.subr.bf16.mxu0 0
  %198 = vmatpush1.bf16.msra.mxu0 %v185
  %199 = vmatprep.subr.bf16.mxu0 0
  %200 = vmatpush1.bf16.msra.mxu0 %v186
  %201 = vmatprep.subr.bf16.mxu0 0
  %202 = vmatpush1.bf16.msra.mxu0 %v187
  %203 = vmatprep.subr.bf16.mxu0 0
  %204 = vmatpush1.bf16.msra.mxu0 %v188
  %205 = vmatprep.subr.bf16.mxu0 0
  %206 = vmatpush1.bf16.msra.mxu0 0
  %207 = vmatprep.subr.bf16.mxu0 0
  %208 = vmatpush1.bf16.msra.mxu0 0
  %209 = vmatprep.subr.bf16.mxu0 0
  %210 = vmatpush1.bf16.msra.mxu0 0
  %211 = vmatprep.subr.bf16.mxu0 0
  %212 = vmatpush1.bf16.msra.mxu0 0
  %213 = vmatprep.subr.bf16.mxu0 0
  %214 = vmatpush1.bf16.msra.mxu0 0
  %215 = vmatprep.subr.bf16.mxu0 0
  %216 = vmatpush1.bf16.msra.mxu0 0
  %217 = vmatprep.subr.bf16.mxu0 0
  %218 = vmatpush1.bf16.msra.mxu0 0
  %219 = vmatprep.subr.bf16.mxu0 0
  %220 = vmatpush1.bf16.msra.mxu0 0
  %221 = vmatprep.subr.bf16.mxu0 0
  %222 = vmatpush1.bf16.msra.mxu0 0
  %223 = vmatprep.subr.bf16.mxu0 0
  %224 = vmatpush1.bf16.msra.mxu0 0
  %225 = vmatprep.subr.bf16.mxu0 0
  %226 = vmatpush1.bf16.msra.mxu0 0
  %227 = vmatprep.subr.bf16.mxu0 0
  %228 = vmatpush1.bf16.msra.mxu0 0
  %229 = vmatprep.mubr.bf16.mxu0 0
  %230 = vmatmul.mubr.bf16.gmra.mrb[0].mxu0 %v195
  %v231 = vpop.f32.mrb[0].mxu0
  %v232 = vadd.f32 %v167, %v231
  %v233 = vpop.f32.mrb[0].mxu0
  %v234 = vpop.f32.mrb[0].mxu0
  %v235 = vpop.f32.mrb[0].mxu0
  %236 = vdwg.mxu0
  %vm237 = vcmp.ge.f32.partialorder %v232, 0.0
  %v238 = vmul.f32 %v232, 0.2
  %v239 = vsel %vm237, %v232, %v238
  %v240 = vpack.c.bf16 %v239, %v239
  %v242 = vlaneseq
  %v243 = vshrl.u32 %v242, 7
  %v244 = vsub.s32 0, %v243
  %v245 = vrot.slane %v70, %v244
  %v255 = vunpack.c.l.b16 %v62
  %v256 = vunpack.c.l.b16 %v63
  %v257 = vunpack.c.l.b16 %v64
  %v258 = vunpack.c.l.b16 %v65
  %v259 = vunpack.c.l.b16 %v66
  %v260 = vunpack.c.l.b16 %v67
  %v261 = vunpack.c.l.b16 %v68
  %v262 = vunpack.c.l.b16 %v69
  %v263 = vpack.c.b16 %v256, %v255
  %v264 = vpack.c.b16 %v258, %v257
  %v265 = vpack.c.b16 %v260, %v259
  %v266 = vpack.c.b16 %v262, %v261
  %v272 = vsel %vm193, %v240, 0
  %274 = vmatprep.subr.bf16.mxu0 0
  %275 = vmatpush1.bf16.msra.mxu0 %v263
  %276 = vmatprep.subr.bf16.mxu0 0
  %277 = vmatpush1.bf16.msra.mxu0 %v264
  %278 = vmatprep.subr.bf16.mxu0 0
  %279 = vmatpush1.bf16.msra.mxu0 %v265
  %280 = vmatprep.subr.bf16.mxu0 0
  %281 = vmatpush1.bf16.msra.mxu0 %v266
  %282 = vmatprep.subr.bf16.mxu0 0
  %283 = vmatpush1.bf16.msra.mxu0 0
  %284 = vmatprep.subr.bf16.mxu0 0
  %285 = vmatpush1.bf16.msra.mxu0 0
  %286 = vmatprep.subr.bf16.mxu0 0
  %287 = vmatpush1.bf16.msra.mxu0 0
  %288 = vmatprep.subr.bf16.mxu0 0
  %289 = vmatpush1.bf16.msra.mxu0 0
  %290 = vmatprep.subr.bf16.mxu0 0
  %291 = vmatpush1.bf16.msra.mxu0 0
  %292 = vmatprep.subr.bf16.mxu0 0
  %293 = vmatpush1.bf16.msra.mxu0 0
  %294 = vmatprep.subr.bf16.mxu0 0
  %295 = vmatpush1.bf16.msra.mxu0 0
  %296 = vmatprep.subr.bf16.mxu0 0
  %297 = vmatpush1.bf16.msra.mxu0 0
  %298 = vmatprep.subr.bf16.mxu0 0
  %299 = vmatpush1.bf16.msra.mxu0 0
  %300 = vmatprep.subr.bf16.mxu0 0
  %301 = vmatpush1.bf16.msra.mxu0 0
  %302 = vmatprep.subr.bf16.mxu0 0
  %303 = vmatpush1.bf16.msra.mxu0 0
  %304 = vmatprep.subr.bf16.mxu0 0
  %305 = vmatpush1.bf16.msra.mxu0 0
  %306 = vmatprep.mubr.bf16.mxu0 0
  %307 = vmatmul.mubr.bf16.gmra.mrb[0].mxu0 %v272
  %v308 = vpop.f32.mrb[0].mxu0
  %v309 = vadd.f32 %v245, %v308
  %v310 = vpop.f32.mrb[0].mxu0
  %v311 = vpop.f32.mrb[0].mxu0
  %v312 = vpop.f32.mrb[0].mxu0
  %313 = vdwg.mxu0
  %vm314 = vcmp.ge.f32.partialorder %v309, 0.0
  %v315 = vmul.f32 %v309, 0.2
  %v316 = vsel %vm314, %v309, %v315
  %v317 = vpack.c.bf16 %v316, %v316
  %v319 = vlaneseq
  %v320 = vshrl.u32 %v319, 7
  %v321 = vsub.s32 0, %v320
  %v322 = vrot.slane %v79, %v321
  %v332 = vunpack.c.l.b16 %v71
  %v333 = vunpack.c.l.b16 %v72
  %v334 = vunpack.c.l.b16 %v73
  %v335 = vunpack.c.l.b16 %v74
  %v336 = vunpack.c.l.b16 %v75
  %v337 = vunpack.c.l.b16 %v76
  %v338 = vunpack.c.l.b16 %v77
  %v339 = vunpack.c.l.b16 %v78
  %v340 = vpack.c.b16 %v333, %v332
  %v341 = vpack.c.b16 %v335, %v334
  %v342 = vpack.c.b16 %v337, %v336
  %v343 = vpack.c.b16 %v339, %v338
  %v349 = vsel %vm193, %v317, 0
  %351 = vmatprep.subr.bf16.mxu0 0
  %352 = vmatpush1.bf16.msra.mxu0 %v340
  %353 = vmatprep.subr.bf16.mxu0 0
  %354 = vmatpush1.bf16.msra.mxu0 %v341
  %355 = vmatprep.subr.bf16.mxu0 0
  %356 = vmatpush1.bf16.msra.mxu0 %v342
  %357 = vmatprep.subr.bf16.mxu0 0
  %358 = vmatpush1.bf16.msra.mxu0 %v343
  %359 = vmatprep.subr.bf16.mxu0 0
  %360 = vmatpush1.bf16.msra.mxu0 0
  %361 = vmatprep.subr.bf16.mxu0 0
  %362 = vmatpush1.bf16.msra.mxu0 0
  %363 = vmatprep.subr.bf16.mxu0 0
  %364 = vmatpush1.bf16.msra.mxu0 0
  %365 = vmatprep.subr.bf16.mxu0 0
  %366 = vmatpush1.bf16.msra.mxu0 0
  %367 = vmatprep.subr.bf16.mxu0 0
  %368 = vmatpush1.bf16.msra.mxu0 0
  %369 = vmatprep.subr.bf16.mxu0 0
  %370 = vmatpush1.bf16.msra.mxu0 0
  %371 = vmatprep.subr.bf16.mxu0 0
  %372 = vmatpush1.bf16.msra.mxu0 0
  %373 = vmatprep.subr.bf16.mxu0 0
  %374 = vmatpush1.bf16.msra.mxu0 0
  %375 = vmatprep.subr.bf16.mxu0 0
  %376 = vmatpush1.bf16.msra.mxu0 0
  %377 = vmatprep.subr.bf16.mxu0 0
  %378 = vmatpush1.bf16.msra.mxu0 0
  %379 = vmatprep.subr.bf16.mxu0 0
  %380 = vmatpush1.bf16.msra.mxu0 0
  %381 = vmatprep.subr.bf16.mxu0 0
  %382 = vmatpush1.bf16.msra.mxu0 0
  %383 = vmatprep.mubr.bf16.mxu0 0
  %384 = vmatmul.mubr.bf16.gmra.mrb[0].mxu0 %v349
  %v385 = vpop.f32.mrb[0].mxu0
  %v386 = vadd.f32 %v322, %v385
  %v387 = vpop.f32.mrb[0].mxu0
  %v388 = vpop.f32.mrb[0].mxu0
  %v389 = vpop.f32.mrb[0].mxu0
  %390 = vdwg.mxu0
  %vm391 = vcmp.ge.f32.partialorder %v386, 0.0
  %v392 = vmul.f32 %v386, 0.2
  %v393 = vsel %vm391, %v386, %v392
  %v395 = vlaneseq
  %v396 = vshrl.u32 %v395, 7
  %v397 = vsub.s32 0, %v396
  %v398 = vrot.slane %v80, %v397
  %v400 = vmul.f32 %v393, %v398
  %v401 = vsel %vm193, %v400, 0.0
  %402 = vadd.xlane.f32.xlu0 %v401
  %v403 = vpop.xlane.xlu0 %402
  %v405 = vlaneseq
  %v406 = vshrl.u32 %v405, 7
  %v407 = vsub.s32 0, %v406
  %v408 = vrot.slane %v81, %v407
  %v410 = vadd.f32 %v403, %v408
  %vm411 = vcmask 7168
  %412 = vst.msk [vmem:[%s13] sm:$0xff] %vm411, %v410
  // Predicated region
  $region54: #{mlp_critic_forward.1} parent=0 // pred_check
    _
  $region55: #{mlp_critic_forward.1} parent=0 // pred_check_branch
    %414 = sbr.rel (0) target = $region57
  $region56: #{mlp_critic_forward.1} parent=0 // pred_region
    _
  $region57: #{mlp_critic_forward.1} parent=0 // pred_fallthru
    _
  // Predicated region
  $region58: #{mlp_critic_forward.1} parent=0 // pred_check
    _
  $region59: #{mlp_critic_forward.1} parent=0 // pred_check_branch
    %416 = sbr.rel (0) target = $region61
  $region60: #{mlp_critic_forward.1} parent=0 // pred_region
    _
  $region61: #{mlp_critic_forward.1} parent=0 // pred_fallthru
    _

</llo_original>
